<compile_context>
chip_gen: v6e
topology: v6e:2x2x1
jax: 0.10.0
libtpu: 0.0.40
codegen_flags: <defaults>
</compile_context>

<pallas_src>
import functools

import jax
import jax.numpy as jnp
from jax import lax
from jax.experimental import pallas as pl
from jax.experimental.pallas import tpu as pltpu


def _round_up(a, b):
    return (a + b - 1) // b * b


@functools.lru_cache(maxsize=1)
def _tpu_info():
    """(vmem_capacity_bytes, tensorcores_per_chip, device_kind) - defensive."""
    kind = ""
    try:
        kind = jax.devices()[0].device_kind.lower()
    except Exception:
        pass
    vmem_cap = 64 * 2**20 if "v7" in kind else 128 * 2**20
    try:
        info = pltpu.get_tpu_info()
        vmem_cap = int(getattr(info, "vmem_capacity_bytes", vmem_cap))
    except Exception:
        pass
    n_tc = 2 if any(tag in kind for tag in ("v7", "v5p", "v4")) else 1
    return vmem_cap, n_tc, kind


# ----------------------------- Pallas kernel -------------------------------- #

def _mm_bias_kernel(wt_ref, b_ref, pt_ref, o_ref):
    # wt_ref: (2Co, Kp)  combined complex weight (VMEM resident)
    # b_ref : (2Co, 1)   combined bias column, f32 (VMEM resident)
    # pt_ref: (Kp, TM)   patch columns for this M tile (bf16/f32)
    # o_ref : (2Co, TM)  f32 output -- lane-dense (last dim = TM >= 128)
    o_ref[...] = (
        jnp.dot(wt_ref[...], pt_ref[...], preferred_element_type=jnp.float32)
        + b_ref[...]
    )


def matmul_bias_pallas(Wt, bias, Pt, *, tm=None):
    """out[N, M] = Wt[N, K] @ Pt[K, M] + bias[:, None]  (f32 accumulate/output).

    M is tiled along lanes; K and N stay whole (weight/bias resident in VMEM).
    """
    N, K = Wt.shape
    K2, M = Pt.shape
    assert K == K2 and bias.shape == (N,)
    assert Wt.dtype == Pt.dtype, (Wt.dtype, Pt.dtype)
    itm = Pt.dtype.itemsize

    vmem_cap, n_tc, kind = _tpu_info()
    # VMEM budget: capacity-derived, ~16 MiB headroom for compiler scratch;
    # never above 100 MiB (v5e/v6e, 128 MiB physical), ~48 MiB on v7x (64 MiB).
    vmem_limit = int(max(32 << 20, min(vmem_cap - (16 << 20), 100 << 20)))

    # M tile: big enough that per-step HBM traffic dwarfs the ~0.35us per-step
    # pipeline overhead (>= ~1 MiB of Pt per step on v7x, 4096 cols elsewhere).
    if tm is None:
        tm = 8192 if "v7" in kind else 4096
    tm_eff = int(min(int(tm), _round_up(M, 128)))

    def _tile_bytes(t):
        return (2 * K * t * itm        # Pt tile, double buffered
                + N * K * itm          # resident weight
                + N * 128 * 4          # bias block (lane padded)
                + 2 * N * t * 4)       # output tile, double buffered

    while tm_eff > 512 and _tile_bytes(tm_eff) > vmem_limit // 2:
        tm_eff = _round_up(max(512, tm_eff // 2), 128)

    # Only force >=2 grid steps when the chip actually has 2 TensorCores
    # (megacore); on 1-TC chips (v5e/v6e) the split just adds overhead.
    if n_tc >= 2 and pl.cdiv(M, tm_eff) < 2 and M > 128:
        tm_eff = int(_round_up(pl.cdiv(M, 2), 128))

    grid = (pl.cdiv(M, tm_eff),)   # cdiv grid: no HBM pad copy of Pt needed
    b2 = bias.reshape(N, 1).astype(jnp.float32)

    cost = pl.CostEstimate(
        flops=2 * M * K * N,
        transcendentals=0,
        bytes_accessed=M * K * itm + N * K * itm + N * M * 4 + N * 4,
    )

    return pl.pallas_call(
        _mm_bias_kernel,
        out_shape=jax.ShapeDtypeStruct((N, M), jnp.float32),
        grid_spec=pltpu.PrefetchScalarGridSpec(
            num_scalar_prefetch=0,
            grid=grid,
            in_specs=[
                pl.BlockSpec((N, K), lambda i: (0, 0)),       # resident weight
                pl.BlockSpec((N, 1), lambda i: (0, 0)),       # resident bias
                pl.BlockSpec((K, tm_eff), lambda i: (0, i)),  # patch columns
            ],
            out_specs=pl.BlockSpec((N, tm_eff), lambda i: (0, i)),
        ),
        compiler_params=pltpu.CompilerParams(
            dimension_semantics=("parallel",),
            vmem_limit_bytes=vmem_limit,
        ),
        cost_estimate=cost,
    )(Wt, b2, Pt)


# --------------------------- module implementation --------------------------- #

class CConvTranspose2dPallas:
    """JAX/Pallas equivalent of the PyTorch CConvTranspose2d (real-stacked input)."""

    def __init__(self, in_channels, out_channels, kernel_size, stride,
                 output_padding=0, padding=0, *, key, tm=None):
        self.in_channels = in_channels
        self.out_channels = out_channels
        self.kernel_size = kernel_size
        self.stride = stride
        self.output_padding = output_padding
        self.padding = padding
        self.tm = tm

        k_wr, k_wi, k_br, k_bi = jax.random.split(key, 4)
        wshape = (in_channels, out_channels, kernel_size, kernel_size)
        # xavier_uniform_, PyTorch fan convention for (in, out, kH, kW) weights
        fan_in = out_channels * kernel_size * kernel_size
        fan_out = in_channels * kernel_size * kernel_size
        bound = (6.0 / (fan_in + fan_out)) ** 0.5
        self.w_real = jax.random.uniform(k_wr, wshape, jnp.float32, -bound, bound)
        self.w_imag = jax.random.uniform(k_wi, wshape, jnp.float32, -bound, bound)
        # default ConvTranspose2d bias init: U(-1/sqrt(fan_in), 1/sqrt(fan_in))
        bb = 1.0 / (fan_in ** 0.5)
        self.b_real = jax.random.uniform(k_br, (out_channels,), jnp.float32, -bb, bb)
        self.b_imag = jax.random.uniform(k_bi, (out_channels,), jnp.float32, -bb, bb)

        # ---- cached combined complex block weight / bias (built once) -------
        # Wc[kh, kw, (ri,ci), (ro,co)] with block structure [[Wr, Wi], [-Wi, Wr]]
        wr = jnp.transpose(self.w_real, (2, 3, 0, 1))    # [k, k, Ci, Co]
        wi = jnp.transpose(self.w_imag, (2, 3, 0, 1))
        top = jnp.concatenate([wr, wi], axis=-1)         # real-input rows
        bot = jnp.concatenate([-wi, wr], axis=-1)        # imag-input rows
        self._Wc = jnp.concatenate([top, bot], axis=2)   # [k, k, 2Ci, 2Co]
        self._bc = jnp.concatenate([self.b_real - self.b_imag,
                                    self.b_real + self.b_imag])      # [2Co]

        # ---- sub-pixel phase taps --------------------------------------------
        # ConvTranspose: out[s*q + r] = sum_{kk : (r + p - kk) % s == 0}
        #                               W[kk] * x[q + (r + p - kk)//s]
        self._taps = []
        for r in range(stride):
            taps = [(kk, (r + padding - kk) // stride)
                    for kk in range(kernel_size)
                    if (r + padding - kk) % stride == 0]
            self._taps.append(taps)
        self._phase_wt_cache = {}

    def _phase_weights(self, dtype):
        """Per-phase weight slices Wt[(rh, rw)] -> [2Co, n_th*n_tw*2Ci], cached."""
        name = jnp.dtype(dtype).name
        if name not in self._phase_wt_cache:
            Ci, Co, s = self.in_channels, self.out_channels, self.stride
            wts = {}
            for rh in range(s):
                for rw in range(s):
                    th, tw = self._taps[rh], self._taps[rw]
                    if not th or not tw:
                        wts[(rh, rw)] = None
                        continue
                    kh_idx = jnp.asarray([kk for kk, _ in th], dtype=jnp.int32)
                    kw_idx = jnp.asarray([kk for kk, _ in tw], dtype=jnp.int32)
                    wp = self._Wc[kh_idx][:, kw_idx]     # [nth, ntw, 2Ci, 2Co]
                    wt = wp.reshape(len(th) * len(tw) * 2 * Ci, 2 * Co).T
                    wts[(rh, rw)] = wt.astype(dtype)
            self._phase_wt_cache[name] = wts
        return self._phase_wt_cache[name]

    def __call__(self, x, compute_dtype=jnp.bfloat16):
        # x: [B, C_in, H, W, 2]   (last axis = real/imag)
        B, Ci, H, W, two = x.shape
        assert Ci == self.in_channels and two == 2
        k, s, p, op = (self.kernel_size, self.stride, self.padding,
                       self.output_padding)
        Co = self.out_channels
        Ho = (H - 1) * s - 2 * p + k + op
        Wo = (W - 1) * s - 2 * p + k + op

        # Channel-major merged complex input [2Ci, B, H, W] (ri major, ci minor),
        # cast to the compute dtype BEFORE any patch gather so the k^2-inflated
        # patch matrices are built / streamed in bf16.
        xcm = jnp.transpose(x, (4, 1, 0, 2, 3)).reshape(2 * Ci, B, H, W)
        xcm = xcm.astype(compute_dtype)

        wts = self._phase_weights(compute_dtype)
        bc = self._bc
        out_ch = jnp.zeros((2, Co, B, Ho, Wo), jnp.float32)

        for rh in range(s):
            Hop = len(range(rh, Ho, s))
            if Hop == 0:
                continue
            for rw in range(s):
                Wop = len(range(rw, Wo, s))
                if Wop == 0:
                    continue
                th, tw = self._taps[rh], self._taps[rw]
                if not th or not tw:
                    # No kernel tap reaches this output phase: bias only.
                    phase = jnp.broadcast_to(bc.reshape(2, Co, 1, 1, 1),
                                             (2, Co, B, Hop, Wop))
                else:
                    dhs = [d for _, d in th]
                    dws = [d for _, d in tw]
                    pad_t = max(0, -min(dhs))
                    pad_b = max(0, max(dhs) + Hop - 1 - (H - 1))
                    pad_l = max(0, -min(dws))
                    pad_r = max(0, max(dws) + Wop - 1 - (W - 1))
                    xp = jnp.pad(xcm, ((0, 0), (0, 0),
                                       (pad_t, pad_b), (pad_l, pad_r)))
                    slabs = [xp[:, :, dh + pad_t:dh + pad_t + Hop,
                                dw + pad_l:dw + pad_l + Wop]
                             for _, dh in th for _, dw in tw]
                    Pt = jnp.stack(slabs, axis=0).reshape(
                        len(th) * len(tw) * 2 * Ci, B * Hop * Wop)
                    out_t = matmul_bias_pallas(wts[(rh, rw)], bc, Pt, tm=self.tm)
                    phase = out_t.reshape(2, Co, B, Hop, Wop)
                out_ch = out_ch.at[:, :, :, rh::s, rw::s].set(phase)

        # TODO(synk): fuse this phase-interleave + relayout into the consumer
        # (or emit bf16) -- it is a full HBM pass over the output tensor.
        return jnp.transpose(out_ch, (2, 1, 3, 4, 0))     # [B, Co, Ho, Wo, 2]


# --------------------------- pure-JAX reference ------------------------------ #

def _convT_ref(x_nchw, w_iokk, bias, stride, kernel_size, padding, output_padding):
    # transposed conv == lhs-dilated conv with flipped/transposed kernel
    w = jnp.transpose(w_iokk, (1, 0, 2, 3))[:, :, ::-1, ::-1]    # OIHW, flipped
    lo = kernel_size - 1 - padding
    hi = kernel_size - 1 - padding + output_padding
    out = lax.conv_general_dilated(
        x_nchw, w, window_strides=(1, 1), padding=[(lo, hi), (lo, hi)],
        lhs_dilation=(stride, stride),
        dimension_numbers=("NCHW", "OIHW", "NCHW"),
        precision=lax.Precision.HIGHEST)
    return out + bias[None, :, None, None]


def _cconvT_ref(mod, x):
    x_r, x_i = x[..., 0], x[..., 1]
    args = (mod.stride, mod.kernel_size, mod.padding, mod.output_padding)
    rr = _convT_ref(x_r, mod.w_real, mod.b_real, *args)
    ii = _convT_ref(x_i, mod.w_imag, mod.b_imag, *args)
    ri = _convT_ref(x_r, mod.w_imag, mod.b_imag, *args)
    ir = _convT_ref(x_i, mod.w_real, mod.b_real, *args)
    return jnp.stack([rr - ii, ri + ir], axis=-1)


# ----------------------------------- main ------------------------------------ #

if __name__ == "__main__":
    key = jax.random.PRNGKey(0)
    k_mod, k_x = jax.random.split(key)

    B, C_in, C_out = 2, 4, 8
    H = W = 8
    kernel_size, stride, padding, output_padding = 3, 2, 1, 1

    mod = CConvTranspose2dPallas(C_in, C_out, kernel_size, stride,
                                 output_padding=output_padding,
                                 padding=padding, key=k_mod)

    x = jax.random.normal(k_x, (B, C_in, H, W, 2), dtype=jnp.float32)

    ref = jax.block_until_ready(_cconvT_ref(mod, x))
    scale = float(jnp.max(jnp.abs(ref)))

    # 1) pipeline exactness: same kernel with f32 operands (scale-aware tol).
    out_f32 = jax.block_until_ready(
        jax.jit(functools.partial(mod.__call__, compute_dtype=jnp.float32))(x))
    assert out_f32.shape == ref.shape, (out_f32.shape, ref.shape)
    err32 = float(jnp.max(jnp.abs(out_f32 - ref)))
    assert err32 <= 5e-3 * scale + 5e-3, (err32, scale)

    # 2) default fast path: bf16 operands, f32 accumulate (looser tolerance).
    out_bf16 = jax.block_until_ready(jax.jit(mod.__call__)(x))
    assert out_bf16.shape == ref.shape, (out_bf16.shape, ref.shape)
    errbf = float(jnp.max(jnp.abs(out_bf16 - ref)))
    assert errbf <= 2e-2 * scale + 2e-2, (errbf, scale)

    print("KERNEL_OK")
</pallas_src>

<mosaic_0001>
module attributes {stable_mosaic.version = 11 : i64} {
  func.func @_mm_bias_kernel(%arg0: i32, %arg1: memref<16x8xf32, #tpu.memory_space<vmem>>, %arg2: memref<16x1xf32, #tpu.memory_space<vmem>>, %arg3: memref<8x128xf32, #tpu.memory_space<vmem>>, %arg4: memref<16x128xf32, #tpu.memory_space<vmem>>) attributes {dimension_semantics = [#tpu.dimension_semantics<parallel>], iteration_bounds = array<i64: 1>, scalar_prefetch = 0 : i64, scratch_operands = 0 : i64, tpu.core_type = #tpu.core_type<tc>, window_params = [{pipeline_mode = #tpu.pipeline_mode<synchronous>, transform_indices = @transform_0, window_bounds = array<i64: 16, 8>}, {pipeline_mode = #tpu.pipeline_mode<synchronous>, transform_indices = @transform_1, window_bounds = array<i64: 16, 1>}, {transform_indices = @transform_2, window_bounds = array<i64: 8, 128>}, {transform_indices = @transform_3, window_bounds = array<i64: 16, 128>}]} {
    %c0 = arith.constant 0 : index
    %c0_0 = arith.constant 0 : index
    %0 = vector.load %arg1[%c0, %c0_0] : memref<16x8xf32, #tpu.memory_space<vmem>>, vector<16x8xf32>
    %c0_1 = arith.constant 0 : index
    %c0_2 = arith.constant 0 : index
    %1 = vector.load %arg3[%c0_1, %c0_2] : memref<8x128xf32, #tpu.memory_space<vmem>>, vector<8x128xf32>
    %cst = arith.constant dense<0.000000e+00> : vector<16x128xf32>
    %2 = tpu.matmul %0, %1, %cst {dimension_numbers = #tpu.dot_dimension_numbers<[1], [0], [0], [1], [0, 0, 1, 1], [], []>} : vector<16x8xf32>, vector<8x128xf32>, vector<16x128xf32> -> vector<16x128xf32>
    %c0_3 = arith.constant 0 : index
    %c0_4 = arith.constant 0 : index
    %3 = vector.load %arg2[%c0_3, %c0_4] : memref<16x1xf32, #tpu.memory_space<vmem>>, vector<16x1xf32>
    %4 = vector.broadcast %3 : vector<16x1xf32> to vector<16x128xf32>
    %5 = arith.addf %2, %4 : vector<16x128xf32>
    %c0_5 = arith.constant 0 : index
    %c0_6 = arith.constant 0 : index
    %6 = vector.load %arg4[%c0_5, %c0_6] : memref<16x128xf32, #tpu.memory_space<vmem>>, vector<16x128xf32>
    tpu.vector_store %arg4[%c0_5, %c0_6], %5 {strides = array<i32>} : memref<16x128xf32, #tpu.memory_space<vmem>>, vector<16x128xf32>,
    return
  }
  func.func @transform_0(%arg0: i32) -> (i32, i32) {
    %c0_i32 = arith.constant 0 : i32
    %c0_i32_0 = arith.constant 0 : i32
    %c0_i32_1 = arith.constant 0 : i32
    return %c0_i32, %c0_i32_0 : i32, i32
  }
  func.func @transform_1(%arg0: i32) -> (i32, i32) {
    %c0_i32 = arith.constant 0 : i32
    %c0_i32_0 = arith.constant 0 : i32
    %c0_i32_1 = arith.constant 0 : i32
    return %c0_i32, %c0_i32_0 : i32, i32
  }
  func.func @transform_2(%arg0: i32) -> (i32, i32) {
    %c0_i32 = arith.constant 0 : i32
    %c0_i32_0 = arith.constant 0 : i32
    return %c0_i32, %arg0 : i32, i32
  }
  func.func @transform_3(%arg0: i32) -> (i32, i32) {
    %c0_i32 = arith.constant 0 : i32
    %c0_i32_0 = arith.constant 0 : i32
    return %c0_i32, %arg0 : i32, i32
  }
}

module attributes {stable_mosaic.version = 11 : i64} {
  func.func @_mm_bias_kernel(%arg0: i32, %arg1: memref<16x32xf32, #tpu.memory_space<vmem>>, %arg2: memref<16x1xf32, #tpu.memory_space<vmem>>, %arg3: memref<32x128xf32, #tpu.memory_space<vmem>>, %arg4: memref<16x128xf32, #tpu.memory_space<vmem>>) attributes {dimension_semantics = [#tpu.dimension_semantics<parallel>], iteration_bounds = array<i64: 1>, scalar_prefetch = 0 : i64, scratch_operands = 0 : i64, tpu.core_type = #tpu.core_type<tc>, window_params = [{pipeline_mode = #tpu.pipeline_mode<synchronous>, transform_indices = @transform_0, window_bounds = array<i64: 16, 32>}, {pipeline_mode = #tpu.pipeline_mode<synchronous>, transform_indices = @transform_1, window_bounds = array<i64: 16, 1>}, {transform_indices = @transform_2, window_bounds = array<i64: 32, 128>}, {transform_indices = @transform_3, window_bounds = array<i64: 16, 128>}]} {
    %c0 = arith.constant 0 : index
    %c0_0 = arith.constant 0 : index
    %0 = vector.load %arg1[%c0, %c0_0] : memref<16x32xf32, #tpu.memory_space<vmem>>, vector<16x32xf32>
    %c0_1 = arith.constant 0 : index
    %c0_2 = arith.constant 0 : index
    %1 = vector.load %arg3[%c0_1, %c0_2] : memref<32x128xf32, #tpu.memory_space<vmem>>, vector<32x128xf32>
    %cst = arith.constant dense<0.000000e+00> : vector<16x128xf32>
    %2 = tpu.matmul %0, %1, %cst {dimension_numbers = #tpu.dot_dimension_numbers<[1], [0], [0], [1], [0, 0, 1, 1], [], []>} : vector<16x32xf32>, vector<32x128xf32>, vector<16x128xf32> -> vector<16x128xf32>
    %c0_3 = arith.constant 0 : index
    %c0_4 = arith.constant 0 : index
    %3 = vector.load %arg2[%c0_3, %c0_4] : memref<16x1xf32, #tpu.memory_space<vmem>>, vector<16x1xf32>
    %4 = vector.broadcast %3 : vector<16x1xf32> to vector<16x128xf32>
    %5 = arith.addf %2, %4 : vector<16x128xf32>
    %c0_5 = arith.constant 0 : index
    %c0_6 = arith.constant 0 : index
    %6 = vector.load %arg4[%c0_5, %c0_6] : memref<16x128xf32, #tpu.memory_space<vmem>>, vector<16x128xf32>
    tpu.vector_store %arg4[%c0_5, %c0_6], %5 {strides = array<i32>} : memref<16x128xf32, #tpu.memory_space<vmem>>, vector<16x128xf32>,
    return
  }
  func.func @transform_0(%arg0: i32) -> (i32, i32) {
    %c0_i32 = arith.constant 0 : i32
    %c0_i32_0 = arith.constant 0 : i32
    %c0_i32_1 = arith.constant 0 : i32
    return %c0_i32, %c0_i32_0 : i32, i32
  }
  func.func @transform_1(%arg0: i32) -> (i32, i32) {
    %c0_i32 = arith.constant 0 : i32
    %c0_i32_0 = arith.constant 0 : i32
    %c0_i32_1 = arith.constant 0 : i32
    return %c0_i32, %c0_i32_0 : i32, i32
  }
  func.func @transform_2(%arg0: i32) -> (i32, i32) {
    %c0_i32 = arith.constant 0 : i32
    %c0_i32_0 = arith.constant 0 : i32
    return %c0_i32, %arg0 : i32, i32
  }
  func.func @transform_3(%arg0: i32) -> (i32, i32) {
    %c0_i32 = arith.constant 0 : i32
    %c0_i32_0 = arith.constant 0 : i32
    return %c0_i32, %arg0 : i32, i32
  }
}

module attributes {stable_mosaic.version = 11 : i64} {
  func.func @_mm_bias_kernel(%arg0: i32, %arg1: memref<16x16xf32, #tpu.memory_space<vmem>>, %arg2: memref<16x1xf32, #tpu.memory_space<vmem>>, %arg3: memref<16x128xf32, #tpu.memory_space<vmem>>, %arg4: memref<16x128xf32, #tpu.memory_space<vmem>>) attributes {dimension_semantics = [#tpu.dimension_semantics<parallel>], iteration_bounds = array<i64: 1>, scalar_prefetch = 0 : i64, scratch_operands = 0 : i64, tpu.core_type = #tpu.core_type<tc>, window_params = [{pipeline_mode = #tpu.pipeline_mode<synchronous>, transform_indices = @transform_0, window_bounds = array<i64: 16, 16>}, {pipeline_mode = #tpu.pipeline_mode<synchronous>, transform_indices = @transform_1, window_bounds = array<i64: 16, 1>}, {transform_indices = @transform_2, window_bounds = array<i64: 16, 128>}, {transform_indices = @transform_3, window_bounds = array<i64: 16, 128>}]} {
    %c0 = arith.constant 0 : index
    %c0_0 = arith.constant 0 : index
    %0 = vector.load %arg1[%c0, %c0_0] : memref<16x16xf32, #tpu.memory_space<vmem>>, vector<16x16xf32>
    %c0_1 = arith.constant 0 : index
    %c0_2 = arith.constant 0 : index
    %1 = vector.load %arg3[%c0_1, %c0_2] : memref<16x128xf32, #tpu.memory_space<vmem>>, vector<16x128xf32>
    %cst = arith.constant dense<0.000000e+00> : vector<16x128xf32>
    %2 = tpu.matmul %0, %1, %cst {dimension_numbers = #tpu.dot_dimension_numbers<[1], [0], [0], [1], [0, 0, 1, 1], [], []>} : vector<16x16xf32>, vector<16x128xf32>, vector<16x128xf32> -> vector<16x128xf32>
    %c0_3 = arith.constant 0 : index
    %c0_4 = arith.constant 0 : index
    %3 = vector.load %arg2[%c0_3, %c0_4] : memref<16x1xf32, #tpu.memory_space<vmem>>, vector<16x1xf32>
    %4 = vector.broadcast %3 : vector<16x1xf32> to vector<16x128xf32>
    %5 = arith.addf %2, %4 : vector<16x128xf32>
    %c0_5 = arith.constant 0 : index
    %c0_6 = arith.constant 0 : index
    %6 = vector.load %arg4[%c0_5, %c0_6] : memref<16x128xf32, #tpu.memory_space<vmem>>, vector<16x128xf32>
    tpu.vector_store %arg4[%c0_5, %c0_6], %5 {strides = array<i32>} : memref<16x128xf32, #tpu.memory_space<vmem>>, vector<16x128xf32>,
    return
  }
  func.func @transform_0(%arg0: i32) -> (i32, i32) {
    %c0_i32 = arith.constant 0 : i32
    %c0_i32_0 = arith.constant 0 : i32
    %c0_i32_1 = arith.constant 0 : i32
    return %c0_i32, %c0_i32_0 : i32, i32
  }
  func.func @transform_1(%arg0: i32) -> (i32, i32) {
    %c0_i32 = arith.constant 0 : i32
    %c0_i32_0 = arith.constant 0 : i32
    %c0_i32_1 = arith.constant 0 : i32
    return %c0_i32, %c0_i32_0 : i32, i32
  }
  func.func @transform_2(%arg0: i32) -> (i32, i32) {
    %c0_i32 = arith.constant 0 : i32
    %c0_i32_0 = arith.constant 0 : i32
    return %c0_i32, %arg0 : i32, i32
  }
  func.func @transform_3(%arg0: i32) -> (i32, i32) {
    %c0_i32 = arith.constant 0 : i32
    %c0_i32_0 = arith.constant 0 : i32
    return %c0_i32, %arg0 : i32, i32
  }
}

</mosaic_0001>

<llo_original>
// kernel: a_call__.4
$region0: #{a_call__.4}
  #allocation0 [shape = 'u32[]', space=smem, size = 0x4, offset = 0x4, fixed_abs, tag = 'smem constant byte address 0x4 - core index']
  #allocation1 [shape = 'u32[144,128]{1,0:T(1,128)}', space=vmem, size = 0x12000, scoped, tag = 'internal scratch']
  %s0 = inlined_call_operand.vmem [shape: f32[16,8], index: 0, kind: input, shape index: {}]
  %s1 = inlined_call_operand.vmem [shape: f32[16,1], index: 1, kind: input, shape index: {}]
  %s2 = inlined_call_operand.vmem [shape: f32[8,128], index: 2, kind: input, shape index: {}]
  %s3 = inlined_call_operand.vmem [shape: f32[16,128], index: 3, kind: output, shape index: {}]
  %s4 = sld [smem:[#allocation0]]
  $region22: #{a_call__.4} parent=0
    _
  %s6 = ssub.s32 1, %s4
  %s7 = scalar_select 0, %s6, %s4
  // Predicated region
  $region2: #{a_call__.4} parent=0 // pred_check
    _
  $region3: #{a_call__.4} parent=0 // pred_check_branch
    %9 = sbr.rel (0) target = $region5
  $region4: #{a_call__.4} parent=0 // pred_region
    _
  $region5: #{a_call__.4} parent=0 // pred_fallthru
    _
  // Predicated region
  $region6: #{a_call__.4} parent=0 // pred_check
    _
  $region7: #{a_call__.4} parent=0 // pred_check_branch
    %11 = sbr.rel (0) target = $region9
  $region8: #{a_call__.4} parent=0 // pred_region
    _
  $region9: #{a_call__.4} parent=0 // pred_fallthru
    _
  // Predicated region
  $region10: #{a_call__.4} parent=0 // pred_check
    _
  $region11: #{a_call__.4} parent=0 // pred_check_branch
    %13 = sbr.rel (0) target = $region13
  $region12: #{a_call__.4} parent=0 // pred_region
    _
  $region13: #{a_call__.4} parent=0 // pred_fallthru
    _
  %v14 = vld [vmem:[%s0] sm:$0xff]
  %v15 = vld [vmem:[%s0 + $0x8] sm:$0xff]
  %v16 = vld [vmem:[%s2] sm:$0xff]
  %v17 = vld [vmem:[%s1] sm:$0xff]
  %v18 = vld [vmem:[%s1 + $0x8] sm:$0xff]
  %20 = vset.pattern.permute.xlu0 0
  %21 = vperm.xlu0 %20, %v17
  %v22 = vpop.permute.xlu0 %21
  %25 = vset.pattern.permute.xlu0 0
  %26 = vperm.xlu0 %25, %v18
  %v27 = vpop.permute.xlu0 %26
  %vm29 = vcmask 64512
  %v31 = vsel %vm29, %v14, 0
  %v34 = vsel %vm29, %v15, 0
  %36 = vmatprep.subr.mxu0 0.0
  %37 = vmatpush1.msra.mxu0 0.0
  %38 = vmatprep.subr.mxu0 0.0
  %39 = vmatpush1.msra.mxu0 0.0
  %40 = vmatprep.subr.mxu0 0.0
  %41 = vmatpush1.msra.mxu0 0.0
  %42 = vmatprep.subr.mxu0 0.0
  %43 = vmatpush1.msra.mxu0 0.0
  %44 = vmatprep.subr.mxu0 0.0
  %45 = vmatpush1.msra.mxu0 0.0
  %46 = vmatprep.subr.mxu0 0.0
  %47 = vmatpush1.msra.mxu0 0.0
  %48 = vmatprep.subr.mxu0 0.0
  %49 = vmatpush1.msra.mxu0 0.0
  %50 = vmatprep.subr.mxu0 0.0
  %51 = vmatpush1.msra.mxu0 0.0
  %52 = vmatprep.subr.mxu0 0.0
  %53 = vmatpush1.msra.mxu0 0.0
  %54 = vmatprep.subr.mxu0 0.0
  %55 = vmatpush1.msra.mxu0 0.0
  %56 = vmatprep.subr.mxu0 0.0
  %57 = vmatpush1.msra.mxu0 0.0
  %58 = vmatprep.subr.mxu0 0.0
  %59 = vmatpush1.msra.mxu0 0.0
  %60 = vmatprep.subr.mxu0 0.0
  %61 = vmatpush1.msra.mxu0 0.0
  %62 = vmatprep.subr.mxu0 0.0
  %63 = vmatpush1.msra.mxu0 0.0
  %64 = vmatprep.subr.mxu0 0.0
  %65 = vmatpush1.msra.mxu0 0.0
  %66 = vmatprep.subr.mxu0 0.0
  %67 = vmatpush1.msra.mxu0 %v16
  %68 = vmatprep.subr.mxu0 0.0
  %69 = vmatpush2.msra.mxu0 0.0
  %70 = vmatprep.subr.mxu0 0.0
  %71 = vmatpush2.msra.mxu0 0.0
  %72 = vmatprep.subr.mxu0 0.0
  %73 = vmatpush2.msra.mxu0 0.0
  %74 = vmatprep.subr.mxu0 0.0
  %75 = vmatpush2.msra.mxu0 0.0
  %76 = vmatprep.subr.mxu0 0.0
  %77 = vmatpush2.msra.mxu0 0.0
  %78 = vmatprep.subr.mxu0 0.0
  %79 = vmatpush2.msra.mxu0 0.0
  %80 = vmatprep.subr.mxu0 0.0
  %81 = vmatpush2.msra.mxu0 0.0
  %82 = vmatprep.subr.mxu0 0.0
  %83 = vmatpush2.msra.mxu0 0.0
  %84 = vmatprep.subr.mxu0 0.0
  %85 = vmatpush2.msra.mxu0 0.0
  %86 = vmatprep.subr.mxu0 0.0
  %87 = vmatpush2.msra.mxu0 0.0
  %88 = vmatprep.subr.mxu0 0.0
  %89 = vmatpush2.msra.mxu0 0.0
  %90 = vmatprep.subr.mxu0 0.0
  %91 = vmatpush2.msra.mxu0 0.0
  %92 = vmatprep.subr.mxu0 0.0
  %93 = vmatpush2.msra.mxu0 0.0
  %94 = vmatprep.subr.mxu0 0.0
  %95 = vmatpush2.msra.mxu0 0.0
  %96 = vmatprep.subr.mxu0 0.0
  %97 = vmatpush2.msra.mxu0 0.0
  %98 = vmatprep.subr.mxu0 0.0
  %99 = vmatpush2.msra.mxu0 0.0
  %100 = vmatprep.mubr.f32.mxu0 0.0
  %101 = vmatmul.mubr.f32.gmra.mxu0 %v31
  %v102 = vpop.f32.mrf.mxu0
  %v103 = vadd.f32 %v22, %v102
  %v104 = vpop.f32.mrf.mxu0
  %105 = vmatprep.mubr.f32.mxu0 0.0
  %106 = vmatmul.mubr.f32.gmra.mxu0 %v34
  %v107 = vpop.f32.mrf.mxu0
  %v108 = vadd.f32 %v27, %v107
  %v109 = vpop.f32.mrf.mxu0
  %110 = vdwg.mxu0
  %111 = vst [vmem:[%s3] sm:$0xff] %v103
  %112 = vst [vmem:[%s3 + $0x8] sm:$0xff] %v108
  // Predicated region
  $region14: #{a_call__.4} parent=0 // pred_check
    _
  $region15: #{a_call__.4} parent=0 // pred_check_branch
    %114 = sbr.rel (0) target = $region17
  $region16: #{a_call__.4} parent=0 // pred_region
    _
  $region17: #{a_call__.4} parent=0 // pred_fallthru
    _
  // Predicated region
  $region18: #{a_call__.4} parent=0 // pred_check
    _
  $region19: #{a_call__.4} parent=0 // pred_check_branch
    %116 = sbr.rel (0) target = $region21
  $region20: #{a_call__.4} parent=0 // pred_region
    _
  $region21: #{a_call__.4} parent=0 // pred_fallthru
    _

// kernel: a_call__.7
$region0: #{a_call__.7}
  #allocation0 [shape = 'u32[]', space=smem, size = 0x4, offset = 0x4, fixed_abs, tag = 'smem constant byte address 0x4 - core index']
  #allocation1 [shape = 'u32[144,128]{1,0:T(1,128)}', space=vmem, size = 0x12000, scoped, tag = 'internal scratch']
  %s0 = inlined_call_operand.vmem [shape: f32[16,32], index: 0, kind: input, shape index: {}]
  %s1 = inlined_call_operand.vmem [shape: f32[16,1], index: 1, kind: input, shape index: {}]
  %s2 = inlined_call_operand.vmem [shape: f32[32,128], index: 2, kind: input, shape index: {}]
  %s3 = inlined_call_operand.vmem [shape: f32[16,128], index: 3, kind: output, shape index: {}]
  %s4 = sld [smem:[#allocation0]]
  $region22: #{a_call__.7} parent=0
    _
  %s6 = ssub.s32 1, %s4
  %s7 = scalar_select 0, %s6, %s4
  // Predicated region
  $region2: #{a_call__.7} parent=0 // pred_check
    _
  $region3: #{a_call__.7} parent=0 // pred_check_branch
    %9 = sbr.rel (0) target = $region5
  $region4: #{a_call__.7} parent=0 // pred_region
    _
  $region5: #{a_call__.7} parent=0 // pred_fallthru
    _
  // Predicated region
  $region6: #{a_call__.7} parent=0 // pred_check
    _
  $region7: #{a_call__.7} parent=0 // pred_check_branch
    %11 = sbr.rel (0) target = $region9
  $region8: #{a_call__.7} parent=0 // pred_region
    _
  $region9: #{a_call__.7} parent=0 // pred_fallthru
    _
  // Predicated region
  $region10: #{a_call__.7} parent=0 // pred_check
    _
  $region11: #{a_call__.7} parent=0 // pred_check_branch
    %13 = sbr.rel (0) target = $region13
  $region12: #{a_call__.7} parent=0 // pred_region
    _
  $region13: #{a_call__.7} parent=0 // pred_fallthru
    _
  %v14 = vld [vmem:[%s0] sm:$0xff]
  %v15 = vld [vmem:[%s0 + $0x8] sm:$0xff]
  %v16 = vld [vmem:[%s2] sm:$0xff]
  %v17 = vld [vmem:[%s2 + $0x8] sm:$0xff]
  %v18 = vld [vmem:[%s2 + $0x10] sm:$0xff]
  %v19 = vld [vmem:[%s2 + $0x18] sm:$0xff]
  %v20 = vld [vmem:[%s1] sm:$0xff]
  %v21 = vld [vmem:[%s1 + $0x8] sm:$0xff]
  %23 = vset.pattern.permute.xlu0 0
  %24 = vperm.xlu0 %23, %v20
  %v25 = vpop.permute.xlu0 %24
  %28 = vset.pattern.permute.xlu0 0
  %29 = vperm.xlu0 %28, %v21
  %v30 = vpop.permute.xlu0 %29
  %vm32 = vcmask 261120
  %v34 = vsel %vm32, %v14, 0
  %v37 = vsel %vm32, %v15, 0
  %39 = vmatprep.subr.mxu0 0.0
  %40 = vmatpush1.msra.mxu0 0.0
  %41 = vmatprep.subr.mxu0 0.0
  %42 = vmatpush1.msra.mxu0 0.0
  %43 = vmatprep.subr.mxu0 0.0
  %44 = vmatpush1.msra.mxu0 0.0
  %45 = vmatprep.subr.mxu0 0.0
  %46 = vmatpush1.msra.mxu0 0.0
  %47 = vmatprep.subr.mxu0 0.0
  %48 = vmatpush1.msra.mxu0 0.0
  %49 = vmatprep.subr.mxu0 0.0
  %50 = vmatpush1.msra.mxu0 0.0
  %51 = vmatprep.subr.mxu0 0.0
  %52 = vmatpush1.msra.mxu0 0.0
  %53 = vmatprep.subr.mxu0 0.0
  %54 = vmatpush1.msra.mxu0 0.0
  %55 = vmatprep.subr.mxu0 0.0
  %56 = vmatpush1.msra.mxu0 0.0
  %57 = vmatprep.subr.mxu0 0.0
  %58 = vmatpush1.msra.mxu0 0.0
  %59 = vmatprep.subr.mxu0 0.0
  %60 = vmatpush1.msra.mxu0 0.0
  %61 = vmatprep.subr.mxu0 0.0
  %62 = vmatpush1.msra.mxu0 0.0
  %63 = vmatprep.subr.mxu0 0.0
  %64 = vmatpush1.msra.mxu0 %v19
  %65 = vmatprep.subr.mxu0 0.0
  %66 = vmatpush1.msra.mxu0 %v18
  %67 = vmatprep.subr.mxu0 0.0
  %68 = vmatpush1.msra.mxu0 %v17
  %69 = vmatprep.subr.mxu0 0.0
  %70 = vmatpush1.msra.mxu0 %v16
  %71 = vmatprep.subr.mxu0 0.0
  %72 = vmatpush2.msra.mxu0 0.0
  %73 = vmatprep.subr.mxu0 0.0
  %74 = vmatpush2.msra.mxu0 0.0
  %75 = vmatprep.subr.mxu0 0.0
  %76 = vmatpush2.msra.mxu0 0.0
  %77 = vmatprep.subr.mxu0 0.0
  %78 = vmatpush2.msra.mxu0 0.0
  %79 = vmatprep.subr.mxu0 0.0
  %80 = vmatpush2.msra.mxu0 0.0
  %81 = vmatprep.subr.mxu0 0.0
  %82 = vmatpush2.msra.mxu0 0.0
  %83 = vmatprep.subr.mxu0 0.0
  %84 = vmatpush2.msra.mxu0 0.0
  %85 = vmatprep.subr.mxu0 0.0
  %86 = vmatpush2.msra.mxu0 0.0
  %87 = vmatprep.subr.mxu0 0.0
  %88 = vmatpush2.msra.mxu0 0.0
  %89 = vmatprep.subr.mxu0 0.0
  %90 = vmatpush2.msra.mxu0 0.0
  %91 = vmatprep.subr.mxu0 0.0
  %92 = vmatpush2.msra.mxu0 0.0
  %93 = vmatprep.subr.mxu0 0.0
  %94 = vmatpush2.msra.mxu0 0.0
  %95 = vmatprep.subr.mxu0 0.0
  %96 = vmatpush2.msra.mxu0 0.0
  %97 = vmatprep.subr.mxu0 0.0
  %98 = vmatpush2.msra.mxu0 0.0
  %99 = vmatprep.subr.mxu0 0.0
  %100 = vmatpush2.msra.mxu0 0.0
  %101 = vmatprep.subr.mxu0 0.0
  %102 = vmatpush2.msra.mxu0 0.0
  %103 = vmatprep.mubr.f32.mxu0 0.0
  %104 = vmatmul.mubr.f32.gmra.mxu0 %v34
  %v105 = vpop.f32.mrf.mxu0
  %v106 = vadd.f32 %v25, %v105
  %v107 = vpop.f32.mrf.mxu0
  %108 = vmatprep.mubr.f32.mxu0 0.0
  %109 = vmatmul.mubr.f32.gmra.mxu0 %v37
  %v110 = vpop.f32.mrf.mxu0
  %v111 = vadd.f32 %v30, %v110
  %v112 = vpop.f32.mrf.mxu0
  %113 = vdwg.mxu0
  %114 = vst [vmem:[%s3] sm:$0xff] %v106
  %115 = vst [vmem:[%s3 + $0x8] sm:$0xff] %v111
  // Predicated region
  $region14: #{a_call__.7} parent=0 // pred_check
    _
  $region15: #{a_call__.7} parent=0 // pred_check_branch
    %117 = sbr.rel (0) target = $region17
  $region16: #{a_call__.7} parent=0 // pred_region
    _
  $region17: #{a_call__.7} parent=0 // pred_fallthru
    _
  // Predicated region
  $region18: #{a_call__.7} parent=0 // pred_check
    _
  $region19: #{a_call__.7} parent=0 // pred_check_branch
    %119 = sbr.rel (0) target = $region21
  $region20: #{a_call__.7} parent=0 // pred_region
    _
  $region21: #{a_call__.7} parent=0 // pred_fallthru
    _

// kernel: a_call__.6
$region0: #{a_call__.6}
  #allocation0 [shape = 'u32[]', space=smem, size = 0x4, offset = 0x4, fixed_abs, tag = 'smem constant byte address 0x4 - core index']
  #allocation1 [shape = 'u32[144,128]{1,0:T(1,128)}', space=vmem, size = 0x12000, scoped, tag = 'internal scratch']
  %s0 = inlined_call_operand.vmem [shape: f32[16,16], index: 0, kind: input, shape index: {}]
  %s1 = inlined_call_operand.vmem [shape: f32[16,1], index: 1, kind: input, shape index: {}]
  %s2 = inlined_call_operand.vmem [shape: f32[16,128], index: 2, kind: input, shape index: {}]
  %s3 = inlined_call_operand.vmem [shape: f32[16,128], index: 3, kind: output, shape index: {}]
  %s4 = sld [smem:[#allocation0]]
  $region22: #{a_call__.6} parent=0
    _
  %s6 = ssub.s32 1, %s4
  %s7 = scalar_select 0, %s6, %s4
  // Predicated region
  $region2: #{a_call__.6} parent=0 // pred_check
    _
  $region3: #{a_call__.6} parent=0 // pred_check_branch
    %9 = sbr.rel (0) target = $region5
  $region4: #{a_call__.6} parent=0 // pred_region
    _
  $region5: #{a_call__.6} parent=0 // pred_fallthru
    _
  // Predicated region
  $region6: #{a_call__.6} parent=0 // pred_check
    _
  $region7: #{a_call__.6} parent=0 // pred_check_branch
    %11 = sbr.rel (0) target = $region9
  $region8: #{a_call__.6} parent=0 // pred_region
    _
  $region9: #{a_call__.6} parent=0 // pred_fallthru
    _
  // Predicated region
  $region10: #{a_call__.6} parent=0 // pred_check
    _
  $region11: #{a_call__.6} parent=0 // pred_check_branch
    %13 = sbr.rel (0) target = $region13
  $region12: #{a_call__.6} parent=0 // pred_region
    _
  $region13: #{a_call__.6} parent=0 // pred_fallthru
    _
  %v14 = vld [vmem:[%s0] sm:$0xff]
  %v15 = vld [vmem:[%s0 + $0x8] sm:$0xff]
  %v16 = vld [vmem:[%s2] sm:$0xff]
  %v17 = vld [vmem:[%s2 + $0x8] sm:$0xff]
  %v18 = vld [vmem:[%s1] sm:$0xff]
  %v19 = vld [vmem:[%s1 + $0x8] sm:$0xff]
  %21 = vset.pattern.permute.xlu0 0
  %22 = vperm.xlu0 %21, %v18
  %v23 = vpop.permute.xlu0 %22
  %26 = vset.pattern.permute.xlu0 0
  %27 = vperm.xlu0 %26, %v19
  %v28 = vpop.permute.xlu0 %27
  %vm30 = vcmask 130048
  %v32 = vsel %vm30, %v14, 0
  %v35 = vsel %vm30, %v15, 0
  %37 = vmatprep.subr.mxu0 0.0
  %38 = vmatpush1.msra.mxu0 0.0
  %39 = vmatprep.subr.mxu0 0.0
  %40 = vmatpush1.msra.mxu0 0.0
  %41 = vmatprep.subr.mxu0 0.0
  %42 = vmatpush1.msra.mxu0 0.0
  %43 = vmatprep.subr.mxu0 0.0
  %44 = vmatpush1.msra.mxu0 0.0
  %45 = vmatprep.subr.mxu0 0.0
  %46 = vmatpush1.msra.mxu0 0.0
  %47 = vmatprep.subr.mxu0 0.0
  %48 = vmatpush1.msra.mxu0 0.0
  %49 = vmatprep.subr.mxu0 0.0
  %50 = vmatpush1.msra.mxu0 0.0
  %51 = vmatprep.subr.mxu0 0.0
  %52 = vmatpush1.msra.mxu0 0.0
  %53 = vmatprep.subr.mxu0 0.0
  %54 = vmatpush1.msra.mxu0 0.0
  %55 = vmatprep.subr.mxu0 0.0
  %56 = vmatpush1.msra.mxu0 0.0
  %57 = vmatprep.subr.mxu0 0.0
  %58 = vmatpush1.msra.mxu0 0.0
  %59 = vmatprep.subr.mxu0 0.0
  %60 = vmatpush1.msra.mxu0 0.0
  %61 = vmatprep.subr.mxu0 0.0
  %62 = vmatpush1.msra.mxu0 0.0
  %63 = vmatprep.subr.mxu0 0.0
  %64 = vmatpush1.msra.mxu0 0.0
  %65 = vmatprep.subr.mxu0 0.0
  %66 = vmatpush1.msra.mxu0 %v17
  %67 = vmatprep.subr.mxu0 0.0
  %68 = vmatpush1.msra.mxu0 %v16
  %69 = vmatprep.subr.mxu0 0.0
  %70 = vmatpush2.msra.mxu0 0.0
  %71 = vmatprep.subr.mxu0 0.0
  %72 = vmatpush2.msra.mxu0 0.0
  %73 = vmatprep.subr.mxu0 0.0
  %74 = vmatpush2.msra.mxu0 0.0
  %75 = vmatprep.subr.mxu0 0.0
  %76 = vmatpush2.msra.mxu0 0.0
  %77 = vmatprep.subr.mxu0 0.0
  %78 = vmatpush2.msra.mxu0 0.0
  %79 = vmatprep.subr.mxu0 0.0
  %80 = vmatpush2.msra.mxu0 0.0
  %81 = vmatprep.subr.mxu0 0.0
  %82 = vmatpush2.msra.mxu0 0.0
  %83 = vmatprep.subr.mxu0 0.0
  %84 = vmatpush2.msra.mxu0 0.0
  %85 = vmatprep.subr.mxu0 0.0
  %86 = vmatpush2.msra.mxu0 0.0
  %87 = vmatprep.subr.mxu0 0.0
  %88 = vmatpush2.msra.mxu0 0.0
  %89 = vmatprep.subr.mxu0 0.0
  %90 = vmatpush2.msra.mxu0 0.0
  %91 = vmatprep.subr.mxu0 0.0
  %92 = vmatpush2.msra.mxu0 0.0
  %93 = vmatprep.subr.mxu0 0.0
  %94 = vmatpush2.msra.mxu0 0.0
  %95 = vmatprep.subr.mxu0 0.0
  %96 = vmatpush2.msra.mxu0 0.0
  %97 = vmatprep.subr.mxu0 0.0
  %98 = vmatpush2.msra.mxu0 0.0
  %99 = vmatprep.subr.mxu0 0.0
  %100 = vmatpush2.msra.mxu0 0.0
  %101 = vmatprep.mubr.f32.mxu0 0.0
  %102 = vmatmul.mubr.f32.gmra.mxu0 %v32
  %v103 = vpop.f32.mrf.mxu0
  %v104 = vadd.f32 %v23, %v103
  %v105 = vpop.f32.mrf.mxu0
  %106 = vmatprep.mubr.f32.mxu0 0.0
  %107 = vmatmul.mubr.f32.gmra.mxu0 %v35
  %v108 = vpop.f32.mrf.mxu0
  %v109 = vadd.f32 %v28, %v108
  %v110 = vpop.f32.mrf.mxu0
  %111 = vdwg.mxu0
  %112 = vst [vmem:[%s3] sm:$0xff] %v104
  %113 = vst [vmem:[%s3 + $0x8] sm:$0xff] %v109
  // Predicated region
  $region14: #{a_call__.6} parent=0 // pred_check
    _
  $region15: #{a_call__.6} parent=0 // pred_check_branch
    %115 = sbr.rel (0) target = $region17
  $region16: #{a_call__.6} parent=0 // pred_region
    _
  $region17: #{a_call__.6} parent=0 // pred_fallthru
    _
  // Predicated region
  $region18: #{a_call__.6} parent=0 // pred_check
    _
  $region19: #{a_call__.6} parent=0 // pred_check_branch
    %117 = sbr.rel (0) target = $region21
  $region20: #{a_call__.6} parent=0 // pred_region
    _
  $region21: #{a_call__.6} parent=0 // pred_fallthru
    _

</llo_original>
